<compile_context>
chip_gen: v6e
topology: v6e:2x2x1
jax: 0.10.0
libtpu: 0.0.40
codegen_flags: <defaults>
</compile_context>

<pallas_src>
import functools
import math

import jax
import jax.numpy as jnp
from jax.experimental import pallas as pl
from jax.experimental.pallas import tpu as pltpu


def _patch_merging_kernel(x_ref, w_ref, gw_ref, bproj_ref, o_ref, *, eps):
    # x_ref:     (R, 2, W/2, 2C)  -- R merged rows, axis 1 = source-row parity
    # w_ref:     (2, 2C, Cout)    -- gamma-folded, parity-permuted reduction weight
    # gw_ref:    (1, Cout)        -- gamma @ W   (f32)
    # bproj_ref: (1, Cout)        -- beta @ W    (f32)
    # o_ref:     (R*W/2, Cout)
    R, _, whalf, two_c = x_ref.shape
    T = R * whalf
    inv_4c = 1.0 / float(2 * two_c)          # 1 / (4*C)

    xb = x_ref[...]                           # (R, 2, W/2, 2C)
    # Row-parity halves; flatten only the matmul operands (free when W/2 % 8 == 0).
    u0 = xb[:, 0, :, :].reshape(T, two_c)
    u1 = xb[:, 1, :, :].reshape(T, two_c)
    u0f = u0.astype(jnp.float32)
    u1f = u1.astype(jnp.float32)

    # One-pass LayerNorm statistics over the full 4C vector (invariant to the
    # channel permutation): var = E[x^2] - mean^2, accumulated in f32.
    s = jnp.sum(u0f, axis=-1, keepdims=True) + jnp.sum(u1f, axis=-1, keepdims=True)
    ssq = (jnp.sum(u0f * u0f, axis=-1, keepdims=True)
           + jnp.sum(u1f * u1f, axis=-1, keepdims=True))
    mean = s * inv_4c
    var = ssq * inv_4c - mean * mean
    inv_std = jax.lax.rsqrt(jnp.maximum(var, 0.0) + eps)

    # gamma is folded into w_ref, so the MXU consumes the raw inputs:
    #   ((u - mean)*inv_std*gamma + beta) @ W
    #     = inv_std * (u @ (gamma*W) - mean * (gamma @ W)) + beta @ W
    w0 = w_ref[0]                             # (2C, Cout)
    w1 = w_ref[1]
    acc = jnp.dot(u0.astype(w0.dtype), w0, preferred_element_type=jnp.float32)
    acc = acc + jnp.dot(u1.astype(w1.dtype), w1, preferred_element_type=jnp.float32)
    out = inv_std * (acc - mean * gw_ref[...]) + bproj_ref[...]
    o_ref[...] = out.astype(o_ref.dtype)


def _vmem_capacity_bytes(default_bytes=64 << 20):
    """Physical VMEM of the local chip; conservative 64 MiB fallback."""
    try:
        info = pltpu.get_tpu_info()
        cap = int(getattr(info, "vmem_capacity_bytes", 0))
        if cap > 0:
            return cap
    except Exception:
        pass
    return default_bytes


def _round_down(x, m):
    return (x // m) * m


def _pick_rows_per_tile(n_rows, whalf, two_c, cout, in_itemsize, out_itemsize,
                        *, target_step_bytes, vmem_budget_bytes, min_steps=2):
    """Pick rows-per-tile R such that:
       - the output block (R*whalf, Cout) is legal: R*whalf % 8 == 0, or the
         block covers the full token dim (full-extent exception),
       - per-step HBM traffic is ~target_step_bytes,
       - double-buffered I/O plus in-kernel f32 temporaries fit the VMEM budget,
       - the grid keeps >= min_steps steps when possible (dual-TC chips)."""
    align = 8 // math.gcd(whalf, 8)           # R multiple of align -> tokens % 8 == 0
    if align > n_rows:
        return n_rows                         # one full-extent block

    io_per_row = whalf * (2 * two_c * in_itemsize + cout * out_itemsize)
    tmp_per_row = whalf * (3 * two_c + 2 * cout) * 4          # f32 body temporaries
    const_bytes = 2 * (2 * two_c * cout * 4 + 2 * cout * 4)   # dbl-buffered weights
    slack = 2 << 20                                           # Mosaic internal scratch

    per_row_vmem = 2 * io_per_row + tmp_per_row               # double-buffered I/O
    avail = vmem_budget_bytes - const_bytes - slack
    if avail >= per_row_vmem * align:
        r_vmem = max(align, _round_down(avail // per_row_vmem, align))
    else:
        r_vmem = align

    r_bytes = max(align, _round_down(max(1, target_step_bytes // io_per_row), align))

    if n_rows >= min_steps * align:
        r_steps = max(align, _round_down(pl.cdiv(n_rows, min_steps), align))
    else:
        r_steps = n_rows

    r = min(r_bytes, r_vmem, r_steps, n_rows)
    if r != n_rows and (r * whalf) % 8 != 0:
        r = n_rows                            # fall back to one full-extent block
    return max(1, r)


def patch_merging(x, w_t, gamma, beta, input_resolution, *, out_dtype=None,
                  eps=1e-5, target_step_bytes=None, vmem_budget_bytes=None,
                  min_steps=2):
    """x: (B, H*W, C) -> (B, (H/2)*(W/2), 2C).

    w_t   : (4C, 2C)  transposed nn.Linear(4C, 2C, bias=False) weight
    gamma : (4C,)     LayerNorm weight
    beta  : (4C,)     LayerNorm bias
    """
    H, W = input_resolution
    B, L, C = x.shape
    assert L == H * W, "input feature has wrong size"
    assert H % 2 == 0 and W % 2 == 0, f"x size ({H}*{W}) are not even."

    out_dtype = jnp.dtype(out_dtype or x.dtype)
    n_rows = B * (H // 2)
    whalf = W // 2
    two_c = 2 * C
    cout = 2 * C
    M = n_rows * whalf

    # Generation-aware sizing: v7x-class chips (<=64 MiB VMEM, ~3.2 TB/s HBM)
    # want more bytes/step to amortize the ~0.35us grid-step overhead; bigger
    # VMEM chips (v5e/v6e, 128 MiB) get a larger pipeline budget.
    vmem_cap = _vmem_capacity_bytes()
    if target_step_bytes is None:
        target_step_bytes = (8 << 20) if vmem_cap <= (64 << 20) else (4 << 20)
    if vmem_budget_bytes is None:
        vmem_budget_bytes = min(int(vmem_cap * 0.6), 64 << 20)
    vmem_limit_bytes = int(max(32 << 20, min(int(vmem_cap * 0.75), 96 << 20)))

    # --- fold LayerNorm affine params into the projection (tiny, wrapper-side) ---
    gamma_f = gamma.astype(jnp.float32)
    beta_f = beta.astype(jnp.float32)
    w_f = w_t.astype(jnp.float32)
    w_scaled = (gamma_f[:, None] * w_f).astype(w_t.dtype)     # gamma * W  (4C, 2C)
    gw_row = (gamma_f @ w_f).reshape(1, cout)                 # gamma @ W  (f32)
    bproj = (beta_f @ w_f).reshape(1, cout)                   # beta  @ W  (f32)

    # torch concat order of the 4C channels: [x0(p0,q0) | x1(p1,q0) | x2(p0,q1) | x3(p1,q1)]
    # in-kernel per-parity layout u_p = [ (p, q=0) C ch | (p, q=1) C ch ]
    def perm_rows(a):
        a0 = jnp.concatenate([a[0:C], a[2 * C:3 * C]], axis=0)      # p = 0
        a1 = jnp.concatenate([a[C:2 * C], a[3 * C:4 * C]], axis=0)  # p = 1
        return jnp.stack([a0, a1], axis=0)

    w_p = perm_rows(w_scaled)                                  # (2, 2C, Cout)

    # Free reshape only (no data movement): (B, H*W, C) -> (B*H/2, 2, W/2, 2C)
    x4 = x.reshape(n_rows, 2, whalf, two_c)

    R = _pick_rows_per_tile(n_rows, whalf, two_c, cout,
                            x.dtype.itemsize, out_dtype.itemsize,
                            target_step_bytes=target_step_bytes,
                            vmem_budget_bytes=vmem_budget_bytes,
                            min_steps=min_steps)
    tile_tokens = R * whalf
    grid = (pl.cdiv(n_rows, R),)       # non-dividing tail is masked by Pallas

    cost = pl.CostEstimate(
        flops=2 * M * (4 * C) * cout + 8 * M * (4 * C),
        transcendentals=M,
        bytes_accessed=(M * (4 * C * x.dtype.itemsize + cout * out_dtype.itemsize)
                        + 2 * (4 * C) * cout * jnp.dtype(w_p.dtype).itemsize),
    )

    out_flat = pl.pallas_call(
        functools.partial(_patch_merging_kernel, eps=eps),
        out_shape=jax.ShapeDtypeStruct((M, cout), out_dtype),
        grid_spec=pltpu.PrefetchScalarGridSpec(
            num_scalar_prefetch=0,
            grid=grid,
            in_specs=[
                pl.BlockSpec((R, 2, whalf, two_c), lambda i: (i, 0, 0, 0)),
                pl.BlockSpec((2, two_c, cout), lambda i: (0, 0, 0)),
                pl.BlockSpec((1, cout), lambda i: (0, 0)),
                pl.BlockSpec((1, cout), lambda i: (0, 0)),
            ],
            out_specs=pl.BlockSpec((tile_tokens, cout), lambda i: (i, 0)),
        ),
        compiler_params=pltpu.CompilerParams(
            dimension_semantics=("parallel",),
            vmem_limit_bytes=vmem_limit_bytes,
        ),
        cost_estimate=cost,
    )(x4, w_p, gw_row, bproj)

    # Merged tokens already in (b, h2, w2) row-major order: free reshape.
    return out_flat.reshape(B, (H // 2) * (W // 2), cout)


def reference_forward(x, w_t, gamma, beta, input_resolution):
    """Pure-JAX reference matching the PyTorch PatchMerging module."""
    H, W = input_resolution
    B, L, C = x.shape
    xi = x.reshape(B, H, W, C)
    x0 = xi[:, 0::2, 0::2, :]
    x1 = xi[:, 1::2, 0::2, :]
    x2 = xi[:, 0::2, 1::2, :]
    x3 = xi[:, 1::2, 1::2, :]
    xc = jnp.concatenate([x0, x1, x2, x3], axis=-1).reshape(B, -1, 4 * C)
    mean = jnp.mean(xc, axis=-1, keepdims=True)
    var = jnp.mean(jnp.square(xc - mean), axis=-1, keepdims=True)
    xn = (xc - mean) * jax.lax.rsqrt(var + 1e-5) * gamma + beta
    return xn @ w_t


if __name__ == "__main__":
    B, H, W, dim = 2, 16, 16, 32
    key = jax.random.PRNGKey(0)
    kx, kw, kg, kb = jax.random.split(key, 4)

    x = jax.random.normal(kx, (B, H * W, dim), dtype=jnp.float32)
    # nn.Linear(4*dim, 2*dim, bias=False): weight (2*dim, 4*dim); we keep W^T.
    w_t = jax.random.normal(kw, (4 * dim, 2 * dim), dtype=jnp.float32) * (1.0 / (4 * dim) ** 0.5)
    # nn.LayerNorm(4*dim) affine params (non-trivial values to exercise the fold).
    gamma = 1.0 + 0.1 * jax.random.normal(kg, (4 * dim,), dtype=jnp.float32)
    beta = 0.1 * jax.random.normal(kb, (4 * dim,), dtype=jnp.float32)

    ref = reference_forward(x, w_t, gamma, beta, (H, W))

    # f32 path (jit-wrapped).
    fwd = jax.jit(functools.partial(patch_merging, input_resolution=(H, W)))
    out = jax.block_until_ready(fwd(x, w_t, gamma, beta))
    assert out.shape == (B, (H // 2) * (W // 2), 2 * dim), out.shape
    assert jnp.allclose(out, ref, atol=5e-4, rtol=5e-4), \
        float(jnp.max(jnp.abs(out - ref)))

    # Non-dividing-grid path (small byte target forces a masked partial tail).
    out_tail = jax.block_until_ready(
        patch_merging(x, w_t, gamma, beta, (H, W), target_step_bytes=20 * 1024))
    assert jnp.allclose(out_tail, ref, atol=5e-4, rtol=5e-4), \
        float(jnp.max(jnp.abs(out_tail - ref)))

    # bf16 path (halved HBM traffic, native bf16 MXU operands); loose tolerance.
    out_bf16 = jax.block_until_ready(
        patch_merging(x.astype(jnp.bfloat16), w_t.astype(jnp.bfloat16),
                      gamma, beta, (H, W)))
    assert out_bf16.dtype == jnp.bfloat16
    assert jnp.allclose(out_bf16.astype(jnp.float32), ref, atol=1e-1, rtol=1e-1), \
        float(jnp.max(jnp.abs(out_bf16.astype(jnp.float32) - ref)))

    print("KERNEL_OK")
</pallas_src>

<mosaic_0001>
module attributes {stable_mosaic.version = 11 : i64} {
  func.func @_patch_merging_kernel(%arg0: i32, %arg1: memref<8x2x8x64xf32, #tpu.memory_space<vmem>>, %arg2: memref<2x64x64xf32, #tpu.memory_space<vmem>>, %arg3: memref<1x64xf32, #tpu.memory_space<vmem>>, %arg4: memref<1x64xf32, #tpu.memory_space<vmem>>, %arg5: memref<64x64xf32, #tpu.memory_space<vmem>>) attributes {dimension_semantics = [#tpu.dimension_semantics<parallel>], iteration_bounds = array<i64: 2>, scalar_prefetch = 0 : i64, scratch_operands = 0 : i64, tpu.core_type = #tpu.core_type<tc>, window_params = [{transform_indices = @transform_0, window_bounds = array<i64: 8, 2, 8, 64>}, {pipeline_mode = #tpu.pipeline_mode<synchronous>, transform_indices = @transform_1, window_bounds = array<i64: 2, 64, 64>}, {pipeline_mode = #tpu.pipeline_mode<synchronous>, transform_indices = @transform_2, window_bounds = array<i64: 1, 64>}, {pipeline_mode = #tpu.pipeline_mode<synchronous>, transform_indices = @transform_3, window_bounds = array<i64: 1, 64>}, {transform_indices = @transform_4, window_bounds = array<i64: 64, 64>}]} {
    %c0 = arith.constant 0 : index
    %c0_0 = arith.constant 0 : index
    %c0_1 = arith.constant 0 : index
    %c0_2 = arith.constant 0 : index
    %0 = vector.load %arg1[%c0, %c0_0, %c0_1, %c0_2] : memref<8x2x8x64xf32, #tpu.memory_space<vmem>>, vector<8x2x8x64xf32>
    %1 = vector.extract_strided_slice %0 {offsets = [0, 0, 0, 0], sizes = [8, 1, 8, 64], strides = [1, 1, 1, 1]} : vector<8x2x8x64xf32> to vector<8x1x8x64xf32>
    %2 = vector.shape_cast %1 : vector<8x1x8x64xf32> to vector<8x8x64xf32>
    %3 = vector.shape_cast %2 : vector<8x8x64xf32> to vector<64x64xf32>
    %4 = vector.extract_strided_slice %0 {offsets = [0, 1, 0, 0], sizes = [8, 1, 8, 64], strides = [1, 1, 1, 1]} : vector<8x2x8x64xf32> to vector<8x1x8x64xf32>
    %5 = vector.shape_cast %4 : vector<8x1x8x64xf32> to vector<8x8x64xf32>
    %6 = vector.shape_cast %5 : vector<8x8x64xf32> to vector<64x64xf32>
    %cst = arith.constant dense<0.000000e+00> : vector<64xf32>
    %7 = vector.multi_reduction <add>, %3, %cst [1] : vector<64x64xf32> to vector<64xf32>
    %8 = vector.shape_cast %7 : vector<64xf32> to vector<64x1xf32>
    %cst_3 = arith.constant dense<0.000000e+00> : vector<64xf32>
    %9 = vector.multi_reduction <add>, %6, %cst_3 [1] : vector<64x64xf32> to vector<64xf32>
    %10 = vector.shape_cast %9 : vector<64xf32> to vector<64x1xf32>
    %11 = arith.addf %8, %10 : vector<64x1xf32>
    %12 = arith.mulf %3, %3 : vector<64x64xf32>
    %cst_4 = arith.constant dense<0.000000e+00> : vector<64xf32>
    %13 = vector.multi_reduction <add>, %12, %cst_4 [1] : vector<64x64xf32> to vector<64xf32>
    %14 = vector.shape_cast %13 : vector<64xf32> to vector<64x1xf32>
    %15 = arith.mulf %6, %6 : vector<64x64xf32>
    %cst_5 = arith.constant dense<0.000000e+00> : vector<64xf32>
    %16 = vector.multi_reduction <add>, %15, %cst_5 [1] : vector<64x64xf32> to vector<64xf32>
    %17 = vector.shape_cast %16 : vector<64xf32> to vector<64x1xf32>
    %18 = arith.addf %14, %17 : vector<64x1xf32>
    %cst_6 = arith.constant 7.812500e-03 : f32
    %19 = vector.broadcast %cst_6 : f32 to vector<64x1xf32>
    %20 = arith.mulf %11, %19 : vector<64x1xf32>
    %cst_7 = arith.constant 7.812500e-03 : f32
    %21 = vector.broadcast %cst_7 : f32 to vector<64x1xf32>
    %22 = arith.mulf %18, %21 : vector<64x1xf32>
    %23 = arith.mulf %20, %20 : vector<64x1xf32>
    %24 = arith.subf %22, %23 : vector<64x1xf32>
    %cst_8 = arith.constant 0.000000e+00 : f32
    %25 = vector.broadcast %cst_8 : f32 to vector<64x1xf32>
    %26 = arith.maximumf %24, %25 : vector<64x1xf32>
    %cst_9 = arith.constant 9.99999974E-6 : f32
    %27 = vector.broadcast %cst_9 : f32 to vector<64x1xf32>
    %28 = arith.addf %26, %27 : vector<64x1xf32>
    %29 = math.rsqrt %28 : vector<64x1xf32>
    %c0_10 = arith.constant 0 : index
    %c0_11 = arith.constant 0 : index
    %c0_12 = arith.constant 0 : index
    %30 = vector.load %arg2[%c0_10, %c0_11, %c0_12] : memref<2x64x64xf32, #tpu.memory_space<vmem>>, vector<1x64x64xf32>
    %31 = vector.shape_cast %30 : vector<1x64x64xf32> to vector<64x64xf32>
    %c1 = arith.constant 1 : index
    %c0_13 = arith.constant 0 : index
    %c0_14 = arith.constant 0 : index
    %32 = vector.load %arg2[%c1, %c0_13, %c0_14] : memref<2x64x64xf32, #tpu.memory_space<vmem>>, vector<1x64x64xf32>
    %33 = vector.shape_cast %32 : vector<1x64x64xf32> to vector<64x64xf32>
    %cst_15 = arith.constant dense<0.000000e+00> : vector<64x64xf32>
    %34 = tpu.matmul %3, %31, %cst_15 {dimension_numbers = #tpu.dot_dimension_numbers<[1], [0], [0], [1], [0, 0, 1, 1], [], []>} : vector<64x64xf32>, vector<64x64xf32>, vector<64x64xf32> -> vector<64x64xf32>
    %cst_16 = arith.constant dense<0.000000e+00> : vector<64x64xf32>
    %35 = tpu.matmul %6, %33, %cst_16 {dimension_numbers = #tpu.dot_dimension_numbers<[1], [0], [0], [1], [0, 0, 1, 1], [], []>} : vector<64x64xf32>, vector<64x64xf32>, vector<64x64xf32> -> vector<64x64xf32>
    %36 = arith.addf %34, %35 : vector<64x64xf32>
    %c0_17 = arith.constant 0 : index
    %c0_18 = arith.constant 0 : index
    %37 = vector.load %arg3[%c0_17, %c0_18] : memref<1x64xf32, #tpu.memory_space<vmem>>, vector<1x64xf32>
    %38 = vector.broadcast %20 : vector<64x1xf32> to vector<64x64xf32>
    %39 = vector.broadcast %37 : vector<1x64xf32> to vector<64x64xf32>
    %40 = arith.mulf %38, %39 : vector<64x64xf32>
    %41 = arith.subf %36, %40 : vector<64x64xf32>
    %42 = vector.broadcast %29 : vector<64x1xf32> to vector<64x64xf32>
    %43 = arith.mulf %42, %41 : vector<64x64xf32>
    %c0_19 = arith.constant 0 : index
    %c0_20 = arith.constant 0 : index
    %44 = vector.load %arg4[%c0_19, %c0_20] : memref<1x64xf32, #tpu.memory_space<vmem>>, vector<1x64xf32>
    %45 = vector.broadcast %44 : vector<1x64xf32> to vector<64x64xf32>
    %46 = arith.addf %43, %45 : vector<64x64xf32>
    %c0_21 = arith.constant 0 : index
    %c0_22 = arith.constant 0 : index
    %47 = vector.load %arg5[%c0_21, %c0_22] : memref<64x64xf32, #tpu.memory_space<vmem>>, vector<64x64xf32>
    tpu.vector_store %arg5[%c0_21, %c0_22], %46 {strides = array<i32>} : memref<64x64xf32, #tpu.memory_space<vmem>>, vector<64x64xf32>,
    return
  }
  func.func @transform_0(%arg0: i32) -> (i32, i32, i32, i32) {
    %c0_i32 = arith.constant 0 : i32
    %c0_i32_0 = arith.constant 0 : i32
    %c0_i32_1 = arith.constant 0 : i32
    %c0_i32_2 = arith.constant 0 : i32
    return %arg0, %c0_i32, %c0_i32_0, %c0_i32_1 : i32, i32, i32, i32
  }
  func.func @transform_1(%arg0: i32) -> (i32, i32, i32) {
    %c0_i32 = arith.constant 0 : i32
    %c0_i32_0 = arith.constant 0 : i32
    %c0_i32_1 = arith.constant 0 : i32
    %c0_i32_2 = arith.constant 0 : i32
    return %c0_i32, %c0_i32_0, %c0_i32_1 : i32, i32, i32
  }
  func.func @transform_2(%arg0: i32) -> (i32, i32) {
    %c0_i32 = arith.constant 0 : i32
    %c0_i32_0 = arith.constant 0 : i32
    %c0_i32_1 = arith.constant 0 : i32
    return %c0_i32, %c0_i32_0 : i32, i32
  }
  func.func @transform_3(%arg0: i32) -> (i32, i32) {
    %c0_i32 = arith.constant 0 : i32
    %c0_i32_0 = arith.constant 0 : i32
    %c0_i32_1 = arith.constant 0 : i32
    return %c0_i32, %c0_i32_0 : i32, i32
  }
  func.func @transform_4(%arg0: i32) -> (i32, i32) {
    %c0_i32 = arith.constant 0 : i32
    %c0_i32_0 = arith.constant 0 : i32
    return %arg0, %c0_i32 : i32, i32
  }
}

</mosaic_0001>

<llo_original>
// kernel: patch_merging.1
$region0: #{patch_merging.1}
  #allocation0 [shape = 'u32[]', space=smem, size = 0x4, offset = 0x4, fixed_abs, tag = 'smem constant byte address 0x4 - core index']
  #allocation1 [shape = 'u32[144,128]{1,0:T(1,128)}', space=vmem, size = 0x12000, scoped, tag = 'internal scratch']
  %s0 = inlined_call_operand.vmem [shape: f32[16,2,8,64], index: 0, kind: input, shape index: {}]
  %s1 = inlined_call_operand.vmem [shape: f32[2,64,64], index: 1, kind: input, shape index: {}]
  %s2 = inlined_call_operand.vmem [shape: f32[1,64], index: 2, kind: input, shape index: {}]
  %s3 = inlined_call_operand.vmem [shape: f32[1,64], index: 3, kind: input, shape index: {}]
  %s4 = inlined_call_operand.hbm [shape: f32[128,64], index: 4, kind: output, shape index: {}]
  %s5 = sld [smem:[#allocation0]]
  $region49: #{patch_merging.1} parent=0
    _
  %s7 = ssub.s32 1, %s5
  %s8 = scalar_select 0, %s7, %s5
  $region1: #{patch_merging.1} parent=0
    #allocation2 [shape = 'u8[65536]{0}', space=vmem, size = 0x10000, scoped, tag = 'output window, operand 0']
    #allocation3 [shape = 's32[2]{0}', space=sflag, size = 0x8, scoped, tag = 'scoped memory for patch_merging.1']
    %9 = vsyncpa [#allocation3], 0
    %s10 = scalar_lea.sflag [#allocation3], 1
    %11 = vsyncpa %s10, 0
    loop: start=0, step=1, limit=4
    $region2: #{patch_merging.1} parent=1 // loop_pre_header
      _
    $region3: #{patch_merging.1} parent=1 // loop_header
      %s13 = sphi 0, %s17
      %p14 = scmp.ge.s32.totalorder %s13, 4
      %s23 = sphi 0, %s25
      %s26 = sphi 0, %s23
      %s27 = sphi 0, %s26
      %s43 = sphi 0, %s27
      %s47 = sphi 0, %s47
      %s49 = sphi 0, %s47
      %s50 = sphi 0, %s49
      %s64 = sphi 0, %s50
      %s68 = sphi 0, %s68
      %s70 = sphi 0, %s68
      %s71 = sphi 0, %s70
      %s85 = sphi 0, %s71
      %s89 = sphi 0, %s89
      %s91 = sphi 0, %s89
      %s92 = sphi 0, %s91
      %s106 = sphi 0, %s92
      %s112 = sphi 0, %s114
      %s115 = sphi 0, %s112
      %s116 = sphi 0, %s115
      %s132 = sphi 0, %s116
    $region4: #{patch_merging.1} parent=1 // loop_header_branch
      %16 = sbr.rel (%p14) target = $region8
    $region5: #{patch_merging.1} parent=1 // loop_body
      %s18 = ssub.s32 %s13, 1
      %s19 = ssub.s32 %s13, 2
      %s20 = sadd.s32 %s13, 1
      %s21 = ssub.s32 %s13, %s20
      %p22 = scmp.eq.s32.totalorder %s21, 0
      %s24 = sadd.s32 %s23, 1
      %s25 = scalar_select %p22, %s23, %s24
      %p28 = pneg %p22
      %p29 = scmp.eq.s32.totalorder %s13, 1
      %p30 = por %p28, %p29
      %p31 = scmp.ne.s32.totalorder %s23, %s26
      %p32 = scmp.eq.s32.totalorder %s13, 0
      %p33 = por %p31, %p32
      %p34 = scmp.ne.s32.totalorder %s23, %s26
      %p35 = scmp.eq.s32.totalorder %s18, 1
      %p36 = por %p34, %p35
      %p37 = scmp.ne.s32.totalorder %s26, %s27
      %p38 = scmp.eq.s32.totalorder %s18, 0
      %p39 = por %p37, %p38
      %p40 = scmp.ne.s32.totalorder %s26, %s27
      %p41 = scmp.eq.s32.totalorder %s19, 1
      %p42 = por %p40, %p41
      %p44 = scmp.ne.s32.totalorder %s27, %s43
      %p45 = scmp.eq.s32.totalorder %s19, 0
      %p46 = por %p44, %p45
      %s48 = sadd.s32 %s47, 1
      %p51 = scmp.eq.s32.totalorder %s13, 1
      %p52 = scmp.ne.s32.totalorder %s47, %s49
      %p53 = scmp.eq.s32.totalorder %s13, 0
      %p54 = por %p52, %p53
      %p55 = scmp.ne.s32.totalorder %s47, %s49
      %p56 = scmp.eq.s32.totalorder %s18, 1
      %p57 = por %p55, %p56
      %p58 = scmp.ne.s32.totalorder %s49, %s50
      %p59 = scmp.eq.s32.totalorder %s18, 0
      %p60 = por %p58, %p59
      %p61 = scmp.ne.s32.totalorder %s49, %s50
      %p62 = scmp.eq.s32.totalorder %s19, 1
      %p63 = por %p61, %p62
      %p65 = scmp.ne.s32.totalorder %s50, %s64
      %p66 = scmp.eq.s32.totalorder %s19, 0
      %p67 = por %p65, %p66
      %s69 = sadd.s32 %s68, 1
      %p72 = scmp.eq.s32.totalorder %s13, 1
      %p73 = scmp.ne.s32.totalorder %s68, %s70
      %p74 = scmp.eq.s32.totalorder %s13, 0
      %p75 = por %p73, %p74
      %p76 = scmp.ne.s32.totalorder %s68, %s70
      %p77 = scmp.eq.s32.totalorder %s18, 1
      %p78 = por %p76, %p77
      %p79 = scmp.ne.s32.totalorder %s70, %s71
      %p80 = scmp.eq.s32.totalorder %s18, 0
      %p81 = por %p79, %p80
      %p82 = scmp.ne.s32.totalorder %s70, %s71
      %p83 = scmp.eq.s32.totalorder %s19, 1
      %p84 = por %p82, %p83
      %p86 = scmp.ne.s32.totalorder %s71, %s85
      %p87 = scmp.eq.s32.totalorder %s19, 0
      %p88 = por %p86, %p87
      %s90 = sadd.s32 %s89, 1
      %p93 = scmp.eq.s32.totalorder %s13, 1
      %p94 = scmp.ne.s32.totalorder %s89, %s91
      %p95 = scmp.eq.s32.totalorder %s13, 0
      %p96 = por %p94, %p95
      %p97 = scmp.ne.s32.totalorder %s89, %s91
      %p98 = scmp.eq.s32.totalorder %s18, 1
      %p99 = por %p97, %p98
      %p100 = scmp.ne.s32.totalorder %s91, %s92
      %p101 = scmp.eq.s32.totalorder %s18, 0
      %p102 = por %p100, %p101
      %p103 = scmp.ne.s32.totalorder %s91, %s92
      %p104 = scmp.eq.s32.totalorder %s19, 1
      %p105 = por %p103, %p104
      %p107 = scmp.ne.s32.totalorder %s92, %s106
      %p108 = scmp.eq.s32.totalorder %s19, 0
      %p109 = por %p107, %p108
      %s110 = ssub.s32 %s13, %s20
      %p111 = scmp.eq.s32.totalorder %s110, 0
      %s113 = sadd.s32 %s112, 1
      %s114 = scalar_select %p111, %s112, %s113
      %p117 = pneg %p111
      %p118 = scmp.eq.s32.totalorder %s13, 1
      %p119 = por %p117, %p118
      %p120 = scmp.ne.s32.totalorder %s112, %s115
      %p121 = scmp.eq.s32.totalorder %s13, 0
      %p122 = por %p120, %p121
      %p123 = scmp.ne.s32.totalorder %s112, %s115
      %p124 = scmp.eq.s32.totalorder %s18, 1
      %p125 = por %p123, %p124
      %p126 = scmp.ne.s32.totalorder %s115, %s116
      %p127 = scmp.eq.s32.totalorder %s18, 0
      %p128 = por %p126, %p127
      %p129 = scmp.ne.s32.totalorder %s115, %s116
      %p130 = scmp.eq.s32.totalorder %s19, 1
      %p131 = por %p129, %p130
      %p133 = scmp.ne.s32.totalorder %s116, %s132
      %p134 = scmp.eq.s32.totalorder %s19, 0
      %p135 = por %p133, %p134
      %p136 = scmp.le.s32.totalorder 1, %s13
      %p137 = scmp.lt.s32.totalorder %s13, 3
      %p138 = pnand %p136, %p137
      %p139 = pneg %p138
      // Predicated region
      $region9: #{patch_merging.1} parent=5 // pred_check
        _
      $region10: #{patch_merging.1} parent=5 // pred_check_branch
        %141 = sbr.rel (%p138) target = $region12
      $region11: #{patch_merging.1} parent=5 // pred_region
        %s142 = ssub.s32 %s13, 1
        // Predicated region
        $region13: #{patch_merging.1} parent=11 // pred_check
          %p143 = pneg %p60
        $region14: #{patch_merging.1} parent=11 // pred_check_branch
          %145 = sbr.rel (%p143) target = $region16
        $region15: #{patch_merging.1} parent=11 // pred_region
          _
        $region16: #{patch_merging.1} parent=11 // pred_fallthru
          _
        // Predicated region
        $region17: #{patch_merging.1} parent=11 // pred_check
          %p146 = pneg %p81
        $region18: #{patch_merging.1} parent=11 // pred_check_branch
          %148 = sbr.rel (%p146) target = $region20
        $region19: #{patch_merging.1} parent=11 // pred_region
          _
        $region20: #{patch_merging.1} parent=11 // pred_fallthru
          _
        // Predicated region
        $region21: #{patch_merging.1} parent=11 // pred_check
          %p149 = pneg %p102
        $region22: #{patch_merging.1} parent=11 // pred_check_branch
          %151 = sbr.rel (%p149) target = $region24
        $region23: #{patch_merging.1} parent=11 // pred_region
          _
        $region24: #{patch_merging.1} parent=11 // pred_fallthru
          _
      $region12: #{patch_merging.1} parent=5 // pred_fallthru
        _
      %p152 = scmp.lt.s32.totalorder %s13, 2
      // Predicated region
      $region25: #{patch_merging.1} parent=5 // pred_check
        %p153 = pneg %p152
      $region26: #{patch_merging.1} parent=5 // pred_check_branch
        %155 = sbr.rel (%p153) target = $region28
      $region27: #{patch_merging.1} parent=5 // pred_region
        // Predicated region
        $region29: #{patch_merging.1} parent=27 // pred_check
          %p156 = pneg %p33
        $region30: #{patch_merging.1} parent=27 // pred_check_branch
          %158 = sbr.rel (%p156) target = $region32
        $region31: #{patch_merging.1} parent=27 // pred_region
          %s159 = smul.u32 8, %s13
          %p160 = scmp.lt.s32.totalorder %s159, 15
          %s161 = scalar_select %p160, %s159, 15
          %s162 = smul.addr %s161, 2
          %s163 = smul.addr %s162, 8
          %s164 = scalar_lea.vmem %s0, %s163
          %s165 = smul.u32 8, %s13
        $region32: #{patch_merging.1} parent=27 // pred_fallthru
          _
      $region28: #{patch_merging.1} parent=5 // pred_fallthru
        _
      %p166 = scmp.le.s32.totalorder 1, %s13
      %p167 = scmp.lt.s32.totalorder %s13, 3
      %p168 = pnand %p166, %p167
      %p169 = pneg %p168
      // Predicated region
      $region33: #{patch_merging.1} parent=5 // pred_check
        _
      $region34: #{patch_merging.1} parent=5 // pred_check_branch
        %171 = sbr.rel (%p168) target = $region36
      $region35: #{patch_merging.1} parent=5 // pred_region
        %s172 = ssub.s32 %s13, 1
        %s173 = smul.u32 8, %s18
        %p174 = scmp.lt.s32.totalorder %s173, 15
        %s175 = scalar_select %p174, %s173, 15
        %s176 = smul.addr %s175, 2
        %s177 = smul.addr %s176, 8
        %s178 = scalar_lea.vmem %s0, %s177
        %p179 = pneg %p39
        %p180 = pneg %p36
        %p181 = pneg %p60
        %p182 = pneg %p57
        %p183 = pneg %p81
        %p184 = pneg %p78
        %p185 = pneg %p102
        %p186 = pneg %p99
        %p187 = pneg %p128
        %p188 = pneg %p125
        %s189 = sand.u32 %s115, 1
        %s190 = scalar_lea.sflag [#allocation3], %s189
        %s191 = sand.u32 %s115, 1
        %s192 = smul.addr %s191, 64
        %s193 = scalar_lea.vmem [#allocation2], %s192
        %s194 = smul.u32 8, %s18
        %p195 = scmp.lt.s32.totalorder %s194, 15
        %s196 = scalar_select %p195, %s194, 15
        %s197 = smul.addr %s196, 2
        %s198 = smul.addr %s197, 8
        %s199 = scalar_lea.vmem %s0, %s198
        %s200 = smul.u32 8, %s18
        %s201 = smul.u32 8, %s18
        %v202 = vld [vmem:[%s199] sm:$0xff]
        %v203 = vld [vmem:[%s199 + $0x8] sm:$0xff]
        %v204 = vld [vmem:[%s199 + $0x10] sm:$0xff]
        %v205 = vld [vmem:[%s199 + $0x18] sm:$0xff]
        %v206 = vld [vmem:[%s199 + $0x20] sm:$0xff]
        %v207 = vld [vmem:[%s199 + $0x28] sm:$0xff]
        %v208 = vld [vmem:[%s199 + $0x30] sm:$0xff]
        %v209 = vld [vmem:[%s199 + $0x38] sm:$0xff]
        %v210 = vld [vmem:[%s199 + $0x40] sm:$0xff]
        %v211 = vld [vmem:[%s199 + $0x48] sm:$0xff]
        %v212 = vld [vmem:[%s199 + $0x50] sm:$0xff]
        %v213 = vld [vmem:[%s199 + $0x58] sm:$0xff]
        %v214 = vld [vmem:[%s199 + $0x60] sm:$0xff]
        %v215 = vld [vmem:[%s199 + $0x68] sm:$0xff]
        %v216 = vld [vmem:[%s199 + $0x70] sm:$0xff]
        %v217 = vld [vmem:[%s199 + $0x78] sm:$0xff]
        %vm218 = vcmask 523264
        %v219 = vsel %vm218, %v202, 0.0
        %220 = vadd.xlane.f32.xlu0 %v219
        %v221 = vpop.xlane.xlu0 %220
        %v222 = vsel %vm218, %v204, 0.0
        %223 = vadd.xlane.f32.xlu0 %v222
        %v224 = vpop.xlane.xlu0 %223
        %v225 = vsel %vm218, %v206, 0.0
        %226 = vadd.xlane.f32.xlu0 %v225
        %v227 = vpop.xlane.xlu0 %226
        %v228 = vsel %vm218, %v208, 0.0
        %229 = vadd.xlane.f32.xlu0 %v228
        %v230 = vpop.xlane.xlu0 %229
        %v231 = vsel %vm218, %v210, 0.0
        %232 = vadd.xlane.f32.xlu0 %v231
        %v233 = vpop.xlane.xlu0 %232
        %v234 = vsel %vm218, %v212, 0.0
        %235 = vadd.xlane.f32.xlu0 %v234
        %v236 = vpop.xlane.xlu0 %235
        %v237 = vsel %vm218, %v214, 0.0
        %238 = vadd.xlane.f32.xlu0 %v237
        %v239 = vpop.xlane.xlu0 %238
        %v240 = vsel %vm218, %v216, 0.0
        %241 = vadd.xlane.f32.xlu0 %v240
        %v242 = vpop.xlane.xlu0 %241
        %v243 = vsel %vm218, %v203, 0.0
        %244 = vadd.xlane.f32.xlu0 %v243
        %v245 = vpop.xlane.xlu0 %244
        %v246 = vsel %vm218, %v205, 0.0
        %247 = vadd.xlane.f32.xlu0 %v246
        %v248 = vpop.xlane.xlu0 %247
        %v249 = vsel %vm218, %v207, 0.0
        %250 = vadd.xlane.f32.xlu0 %v249
        %v251 = vpop.xlane.xlu0 %250
        %v252 = vsel %vm218, %v209, 0.0
        %253 = vadd.xlane.f32.xlu0 %v252
        %v254 = vpop.xlane.xlu0 %253
        %v255 = vsel %vm218, %v211, 0.0
        %256 = vadd.xlane.f32.xlu0 %v255
        %v257 = vpop.xlane.xlu0 %256
        %v258 = vsel %vm218, %v213, 0.0
        %259 = vadd.xlane.f32.xlu0 %v258
        %v260 = vpop.xlane.xlu0 %259
        %v261 = vsel %vm218, %v215, 0.0
        %262 = vadd.xlane.f32.xlu0 %v261
        %v263 = vpop.xlane.xlu0 %262
        %v264 = vsel %vm218, %v217, 0.0
        %265 = vadd.xlane.f32.xlu0 %v264
        %v266 = vpop.xlane.xlu0 %265
        %v267 = vadd.f32 %v221, %v245
        %v268 = vadd.f32 %v224, %v248
        %v269 = vadd.f32 %v227, %v251
        %v270 = vadd.f32 %v230, %v254
        %v271 = vadd.f32 %v233, %v257
        %v272 = vadd.f32 %v236, %v260
        %v273 = vadd.f32 %v239, %v263
        %v274 = vadd.f32 %v242, %v266
        %v275 = vmul.f32 %v202, %v202
        %v276 = vmul.f32 %v204, %v204
        %v277 = vmul.f32 %v206, %v206
        %v278 = vmul.f32 %v208, %v208
        %v279 = vmul.f32 %v210, %v210
        %v280 = vmul.f32 %v212, %v212
        %v281 = vmul.f32 %v214, %v214
        %v282 = vmul.f32 %v216, %v216
        %v283 = vsel %vm218, %v275, 0.0
        %284 = vadd.xlane.f32.xlu0 %v283
        %v285 = vpop.xlane.xlu0 %284
        %v286 = vsel %vm218, %v276, 0.0
        %287 = vadd.xlane.f32.xlu0 %v286
        %v288 = vpop.xlane.xlu0 %287
        %v289 = vsel %vm218, %v277, 0.0
        %290 = vadd.xlane.f32.xlu0 %v289
        %v291 = vpop.xlane.xlu0 %290
        %v292 = vsel %vm218, %v278, 0.0
        %293 = vadd.xlane.f32.xlu0 %v292
        %v294 = vpop.xlane.xlu0 %293
        %v295 = vsel %vm218, %v279, 0.0
        %296 = vadd.xlane.f32.xlu0 %v295
        %v297 = vpop.xlane.xlu0 %296
        %v298 = vsel %vm218, %v280, 0.0
        %299 = vadd.xlane.f32.xlu0 %v298
        %v300 = vpop.xlane.xlu0 %299
        %v301 = vsel %vm218, %v281, 0.0
        %302 = vadd.xlane.f32.xlu0 %v301
        %v303 = vpop.xlane.xlu0 %302
        %v304 = vsel %vm218, %v282, 0.0
        %305 = vadd.xlane.f32.xlu0 %v304
        %v306 = vpop.xlane.xlu0 %305
        %v307 = vmul.f32 %v203, %v203
        %v308 = vmul.f32 %v205, %v205
        %v309 = vmul.f32 %v207, %v207
        %v310 = vmul.f32 %v209, %v209
        %v311 = vmul.f32 %v211, %v211
        %v312 = vmul.f32 %v213, %v213
        %v313 = vmul.f32 %v215, %v215
        %v314 = vmul.f32 %v217, %v217
        %v315 = vsel %vm218, %v307, 0.0
        %316 = vadd.xlane.f32.xlu0 %v315
        %v317 = vpop.xlane.xlu0 %316
        %v318 = vsel %vm218, %v308, 0.0
        %319 = vadd.xlane.f32.xlu0 %v318
        %v320 = vpop.xlane.xlu0 %319
        %v321 = vsel %vm218, %v309, 0.0
        %322 = vadd.xlane.f32.xlu0 %v321
        %v323 = vpop.xlane.xlu0 %322
        %v324 = vsel %vm218, %v310, 0.0
        %325 = vadd.xlane.f32.xlu0 %v324
        %v326 = vpop.xlane.xlu0 %325
        %v327 = vsel %vm218, %v311, 0.0
        %328 = vadd.xlane.f32.xlu0 %v327
        %v329 = vpop.xlane.xlu0 %328
        %v330 = vsel %vm218, %v312, 0.0
        %331 = vadd.xlane.f32.xlu0 %v330
        %v332 = vpop.xlane.xlu0 %331
        %v333 = vsel %vm218, %v313, 0.0
        %334 = vadd.xlane.f32.xlu0 %v333
        %v335 = vpop.xlane.xlu0 %334
        %v336 = vsel %vm218, %v314, 0.0
        %337 = vadd.xlane.f32.xlu0 %v336
        %v338 = vpop.xlane.xlu0 %337
        %v339 = vadd.f32 %v285, %v317
        %v340 = vadd.f32 %v288, %v320
        %v341 = vadd.f32 %v291, %v323
        %v342 = vadd.f32 %v294, %v326
        %v343 = vadd.f32 %v297, %v329
        %v344 = vadd.f32 %v300, %v332
        %v345 = vadd.f32 %v303, %v335
        %v346 = vadd.f32 %v306, %v338
        %v347 = vmul.f32 %v267, 0.0078125
        %v348 = vmul.f32 %v268, 0.0078125
        %v349 = vmul.f32 %v269, 0.0078125
        %v350 = vmul.f32 %v270, 0.0078125
        %v351 = vmul.f32 %v271, 0.0078125
        %v352 = vmul.f32 %v272, 0.0078125
        %v353 = vmul.f32 %v273, 0.0078125
        %v354 = vmul.f32 %v274, 0.0078125
        %v355 = vmul.f32 %v339, 0.0078125
        %v356 = vmul.f32 %v340, 0.0078125
        %v357 = vmul.f32 %v341, 0.0078125
        %v358 = vmul.f32 %v342, 0.0078125
        %v359 = vmul.f32 %v343, 0.0078125
        %v360 = vmul.f32 %v344, 0.0078125
        %v361 = vmul.f32 %v345, 0.0078125
        %v362 = vmul.f32 %v346, 0.0078125
        %v363 = vmul.f32 %v347, %v347
        %v364 = vmul.f32 %v348, %v348
        %v365 = vmul.f32 %v349, %v349
        %v366 = vmul.f32 %v350, %v350
        %v367 = vmul.f32 %v351, %v351
        %v368 = vmul.f32 %v352, %v352
        %v369 = vmul.f32 %v353, %v353
        %v370 = vmul.f32 %v354, %v354
        %v371 = vsub.f32 %v355, %v363
        %v372 = vsub.f32 %v356, %v364
        %v373 = vsub.f32 %v357, %v365
        %v374 = vsub.f32 %v358, %v366
        %v375 = vsub.f32 %v359, %v367
        %v376 = vsub.f32 %v360, %v368
        %v377 = vsub.f32 %v361, %v369
        %v378 = vsub.f32 %v362, %v370
        %v379 = vmax.f32 %v371, 0.0
        %v380 = vmax.f32 %v372, 0.0
        %v381 = vmax.f32 %v373, 0.0
        %v382 = vmax.f32 %v374, 0.0
        %v383 = vmax.f32 %v375, 0.0
        %v384 = vmax.f32 %v376, 0.0
        %v385 = vmax.f32 %v377, 0.0
        %v386 = vmax.f32 %v378, 0.0
        %v387 = vadd.f32 %v379, 1e-05
        %v388 = vadd.f32 %v380, 1e-05
        %v389 = vadd.f32 %v381, 1e-05
        %v390 = vadd.f32 %v382, 1e-05
        %v391 = vadd.f32 %v383, 1e-05
        %v392 = vadd.f32 %v384, 1e-05
        %v393 = vadd.f32 %v385, 1e-05
        %v394 = vadd.f32 %v386, 1e-05
        %v395 = vrsqrt.pop %v387
        %v396 = vrsqrt.pop %v388
        %v397 = vrsqrt.pop %v389
        %v398 = vrsqrt.pop %v390
        %v399 = vrsqrt.pop %v391
        %v400 = vrsqrt.pop %v392
        %v401 = vrsqrt.pop %v393
        %v402 = vrsqrt.pop %v394
        %v403 = vld [vmem:[%s1] sm:$0xff]
        %v404 = vld [vmem:[%s1 + $0x8] sm:$0xff]
        %v405 = vld [vmem:[%s1 + $0x10] sm:$0xff]
        %v406 = vld [vmem:[%s1 + $0x18] sm:$0xff]
        %v407 = vld [vmem:[%s1 + $0x20] sm:$0xff]
        %v408 = vld [vmem:[%s1 + $0x28] sm:$0xff]
        %v409 = vld [vmem:[%s1 + $0x30] sm:$0xff]
        %v410 = vld [vmem:[%s1 + $0x38] sm:$0xff]
        %s411 = scalar_lea.vmem %s1, 64
        %v412 = vld [vmem:[%s411] sm:$0xff]
        %v413 = vld [vmem:[%s411 + $0x8] sm:$0xff]
        %v414 = vld [vmem:[%s411 + $0x10] sm:$0xff]
        %v415 = vld [vmem:[%s411 + $0x18] sm:$0xff]
        %v416 = vld [vmem:[%s411 + $0x20] sm:$0xff]
        %v417 = vld [vmem:[%s411 + $0x28] sm:$0xff]
        %v418 = vld [vmem:[%s411 + $0x30] sm:$0xff]
        %v419 = vld [vmem:[%s411 + $0x38] sm:$0xff]
        %v421 = vsel %vm218, %v203, 0
        %v424 = vsel %vm218, %v205, 0
        %v427 = vsel %vm218, %v207, 0
        %v430 = vsel %vm218, %v209, 0
        %v433 = vsel %vm218, %v211, 0
        %v436 = vsel %vm218, %v213, 0
        %v439 = vsel %vm218, %v215, 0
        %v442 = vsel %vm218, %v217, 0
        %444 = vmatprep.subr.mxu0 0.0
        %445 = vmatpush1.msra.mxu0 0.0
        %446 = vmatprep.subr.mxu0 0.0
        %447 = vmatpush1.msra.mxu0 0.0
        %448 = vmatprep.subr.mxu0 0.0
        %449 = vmatpush1.msra.mxu0 0.0
        %450 = vmatprep.subr.mxu0 0.0
        %451 = vmatpush1.msra.mxu0 0.0
        %452 = vmatprep.subr.mxu0 0.0
        %453 = vmatpush1.msra.mxu0 0.0
        %454 = vmatprep.subr.mxu0 0.0
        %455 = vmatpush1.msra.mxu0 0.0
        %456 = vmatprep.subr.mxu0 0.0
        %457 = vmatpush1.msra.mxu0 0.0
        %458 = vmatprep.subr.mxu0 0.0
        %459 = vmatpush1.msra.mxu0 0.0
        %460 = vmatprep.subr.mxu0 0.0
        %461 = vmatpush1.msra.mxu0 %v419
        %462 = vmatprep.subr.mxu0 0.0
        %463 = vmatpush1.msra.mxu0 %v418
        %464 = vmatprep.subr.mxu0 0.0
        %465 = vmatpush1.msra.mxu0 %v417
        %466 = vmatprep.subr.mxu0 0.0
        %467 = vmatpush1.msra.mxu0 %v416
        %468 = vmatprep.subr.mxu0 0.0
        %469 = vmatpush1.msra.mxu0 %v415
        %470 = vmatprep.subr.mxu0 0.0
        %471 = vmatpush1.msra.mxu0 %v414
        %472 = vmatprep.subr.mxu0 0.0
        %473 = vmatpush1.msra.mxu0 %v413
        %474 = vmatprep.subr.mxu0 0.0
        %475 = vmatpush1.msra.mxu0 %v412
        %476 = vmatprep.subr.mxu0 0.0
        %477 = vmatpush2.msra.mxu0 0.0
        %478 = vmatprep.subr.mxu0 0.0
        %479 = vmatpush2.msra.mxu0 0.0
        %480 = vmatprep.subr.mxu0 0.0
        %481 = vmatpush2.msra.mxu0 0.0
        %482 = vmatprep.subr.mxu0 0.0
        %483 = vmatpush2.msra.mxu0 0.0
        %484 = vmatprep.subr.mxu0 0.0
        %485 = vmatpush2.msra.mxu0 0.0
        %486 = vmatprep.subr.mxu0 0.0
        %487 = vmatpush2.msra.mxu0 0.0
        %488 = vmatprep.subr.mxu0 0.0
        %489 = vmatpush2.msra.mxu0 0.0
        %490 = vmatprep.subr.mxu0 0.0
        %491 = vmatpush2.msra.mxu0 0.0
        %492 = vmatprep.subr.mxu0 0.0
        %493 = vmatpush2.msra.mxu0 0.0
        %494 = vmatprep.subr.mxu0 0.0
        %495 = vmatpush2.msra.mxu0 0.0
        %496 = vmatprep.subr.mxu0 0.0
        %497 = vmatpush2.msra.mxu0 0.0
        %498 = vmatprep.subr.mxu0 0.0
        %499 = vmatpush2.msra.mxu0 0.0
        %500 = vmatprep.subr.mxu0 0.0
        %501 = vmatpush2.msra.mxu0 0.0
        %502 = vmatprep.subr.mxu0 0.0
        %503 = vmatpush2.msra.mxu0 0.0
        %504 = vmatprep.subr.mxu0 0.0
        %505 = vmatpush2.msra.mxu0 0.0
        %506 = vmatprep.subr.mxu0 0.0
        %507 = vmatpush2.msra.mxu0 0.0
        %508 = vmatprep.mubr.f32.mxu0 0.0
        %509 = vmatmul.mubr.f32.gmra.mxu0 %v421
        %v510 = vpop.f32.mrf.mxu0
        %v511 = vadd.f32 0.0, %v510
        %v512 = vpop.f32.mrf.mxu0
        %513 = vmatprep.mubr.f32.mxu0 0.0
        %514 = vmatmul.mubr.f32.gmra.mxu0 %v424
        %v515 = vpop.f32.mrf.mxu0
        %v516 = vadd.f32 0.0, %v515
        %v517 = vpop.f32.mrf.mxu0
        %518 = vmatprep.mubr.f32.mxu0 0.0
        %519 = vmatmul.mubr.f32.gmra.mxu0 %v427
        %v520 = vpop.f32.mrf.mxu0
        %v521 = vadd.f32 0.0, %v520
        %v522 = vpop.f32.mrf.mxu0
        %523 = vmatprep.mubr.f32.mxu0 0.0
        %524 = vmatmul.mubr.f32.gmra.mxu0 %v430
        %v525 = vpop.f32.mrf.mxu0
        %v526 = vadd.f32 0.0, %v525
        %v527 = vpop.f32.mrf.mxu0
        %528 = vmatprep.mubr.f32.mxu0 0.0
        %529 = vmatmul.mubr.f32.gmra.mxu0 %v433
        %v530 = vpop.f32.mrf.mxu0
        %v531 = vadd.f32 0.0, %v530
        %v532 = vpop.f32.mrf.mxu0
        %533 = vmatprep.mubr.f32.mxu0 0.0
        %534 = vmatmul.mubr.f32.gmra.mxu0 %v436
        %v535 = vpop.f32.mrf.mxu0
        %v536 = vadd.f32 0.0, %v535
        %v537 = vpop.f32.mrf.mxu0
        %538 = vmatprep.mubr.f32.mxu0 0.0
        %539 = vmatmul.mubr.f32.gmra.mxu0 %v439
        %v540 = vpop.f32.mrf.mxu0
        %v541 = vadd.f32 0.0, %v540
        %v542 = vpop.f32.mrf.mxu0
        %543 = vmatprep.mubr.f32.mxu0 0.0
        %544 = vmatmul.mubr.f32.gmra.mxu0 %v442
        %v545 = vpop.f32.mrf.mxu0
        %v546 = vadd.f32 0.0, %v545
        %v547 = vpop.f32.mrf.mxu0
        %548 = vdwg.mxu0
        %v550 = vsel %vm218, %v202, 0
        %v553 = vsel %vm218, %v204, 0
        %v556 = vsel %vm218, %v206, 0
        %v559 = vsel %vm218, %v208, 0
        %v562 = vsel %vm218, %v210, 0
        %v565 = vsel %vm218, %v212, 0
        %v568 = vsel %vm218, %v214, 0
        %v571 = vsel %vm218, %v216, 0
        %573 = vmatprep.subr.mxu0 0.0
        %574 = vmatpush1.msra.mxu0 0.0
        %575 = vmatprep.subr.mxu0 0.0
        %576 = vmatpush1.msra.mxu0 0.0
        %577 = vmatprep.subr.mxu0 0.0
        %578 = vmatpush1.msra.mxu0 0.0
        %579 = vmatprep.subr.mxu0 0.0
        %580 = vmatpush1.msra.mxu0 0.0
        %581 = vmatprep.subr.mxu0 0.0
        %582 = vmatpush1.msra.mxu0 0.0
        %583 = vmatprep.subr.mxu0 0.0
        %584 = vmatpush1.msra.mxu0 0.0
        %585 = vmatprep.subr.mxu0 0.0
        %586 = vmatpush1.msra.mxu0 0.0
        %587 = vmatprep.subr.mxu0 0.0
        %588 = vmatpush1.msra.mxu0 0.0
        %589 = vmatprep.subr.mxu0 0.0
        %590 = vmatpush1.msra.mxu0 %v410
        %591 = vmatprep.subr.mxu0 0.0
        %592 = vmatpush1.msra.mxu0 %v409
        %593 = vmatprep.subr.mxu0 0.0
        %594 = vmatpush1.msra.mxu0 %v408
        %595 = vmatprep.subr.mxu0 0.0
        %596 = vmatpush1.msra.mxu0 %v407
        %597 = vmatprep.subr.mxu0 0.0
        %598 = vmatpush1.msra.mxu0 %v406
        %599 = vmatprep.subr.mxu0 0.0
        %600 = vmatpush1.msra.mxu0 %v405
        %601 = vmatprep.subr.mxu0 0.0
        %602 = vmatpush1.msra.mxu0 %v404
        %603 = vmatprep.subr.mxu0 0.0
        %604 = vmatpush1.msra.mxu0 %v403
        %605 = vmatprep.subr.mxu0 0.0
        %606 = vmatpush2.msra.mxu0 0.0
        %607 = vmatprep.subr.mxu0 0.0
        %608 = vmatpush2.msra.mxu0 0.0
        %609 = vmatprep.subr.mxu0 0.0
        %610 = vmatpush2.msra.mxu0 0.0
        %611 = vmatprep.subr.mxu0 0.0
        %612 = vmatpush2.msra.mxu0 0.0
        %613 = vmatprep.subr.mxu0 0.0
        %614 = vmatpush2.msra.mxu0 0.0
        %615 = vmatprep.subr.mxu0 0.0
        %616 = vmatpush2.msra.mxu0 0.0
        %617 = vmatprep.subr.mxu0 0.0
        %618 = vmatpush2.msra.mxu0 0.0
        %619 = vmatprep.subr.mxu0 0.0
        %620 = vmatpush2.msra.mxu0 0.0
        %621 = vmatprep.subr.mxu0 0.0
        %622 = vmatpush2.msra.mxu0 0.0
        %623 = vmatprep.subr.mxu0 0.0
        %624 = vmatpush2.msra.mxu0 0.0
        %625 = vmatprep.subr.mxu0 0.0
        %626 = vmatpush2.msra.mxu0 0.0
        %627 = vmatprep.subr.mxu0 0.0
        %628 = vmatpush2.msra.mxu0 0.0
        %629 = vmatprep.subr.mxu0 0.0
        %630 = vmatpush2.msra.mxu0 0.0
        %631 = vmatprep.subr.mxu0 0.0
        %632 = vmatpush2.msra.mxu0 0.0
        %633 = vmatprep.subr.mxu0 0.0
        %634 = vmatpush2.msra.mxu0 0.0
        %635 = vmatprep.subr.mxu0 0.0
        %636 = vmatpush2.msra.mxu0 0.0
        %637 = vmatprep.mubr.f32.mxu0 0.0
        %638 = vmatmul.mubr.f32.gmra.mxu0 %v550
        %v639 = vpop.f32.mrf.mxu0
        %v640 = vadd.f32 %v511, %v639
        %v641 = vpop.f32.mrf.mxu0
        %642 = vmatprep.mubr.f32.mxu0 0.0
        %643 = vmatmul.mubr.f32.gmra.mxu0 %v553
        %v644 = vpop.f32.mrf.mxu0
        %v645 = vadd.f32 %v516, %v644
        %v646 = vpop.f32.mrf.mxu0
        %647 = vmatprep.mubr.f32.mxu0 0.0
        %648 = vmatmul.mubr.f32.gmra.mxu0 %v556
        %v649 = vpop.f32.mrf.mxu0
        %v650 = vadd.f32 %v521, %v649
        %v651 = vpop.f32.mrf.mxu0
        %652 = vmatprep.mubr.f32.mxu0 0.0
        %653 = vmatmul.mubr.f32.gmra.mxu0 %v559
        %v654 = vpop.f32.mrf.mxu0
        %v655 = vadd.f32 %v526, %v654
        %v656 = vpop.f32.mrf.mxu0
        %657 = vmatprep.mubr.f32.mxu0 0.0
        %658 = vmatmul.mubr.f32.gmra.mxu0 %v562
        %v659 = vpop.f32.mrf.mxu0
        %v660 = vadd.f32 %v531, %v659
        %v661 = vpop.f32.mrf.mxu0
        %662 = vmatprep.mubr.f32.mxu0 0.0
        %663 = vmatmul.mubr.f32.gmra.mxu0 %v565
        %v664 = vpop.f32.mrf.mxu0
        %v665 = vadd.f32 %v536, %v664
        %v666 = vpop.f32.mrf.mxu0
        %667 = vmatprep.mubr.f32.mxu0 0.0
        %668 = vmatmul.mubr.f32.gmra.mxu0 %v568
        %v669 = vpop.f32.mrf.mxu0
        %v670 = vadd.f32 %v541, %v669
        %v671 = vpop.f32.mrf.mxu0
        %672 = vmatprep.mubr.f32.mxu0 0.0
        %673 = vmatmul.mubr.f32.gmra.mxu0 %v571
        %v674 = vpop.f32.mrf.mxu0
        %v675 = vadd.f32 %v546, %v674
        %v676 = vpop.f32.mrf.mxu0
        %677 = vdwg.mxu0
        %v678 = vld [vmem:[%s2] sm:$0x1]
        %v680 = vlaneseq
        %v681 = vshrl.u32 %v680, 7
        %v682 = vsub.s32 0, %v681
        %v683 = vrot.slane %v678, %v682
        %v685 = vmul.f32 %v347, %v683
        %v686 = vmul.f32 %v348, %v683
        %v687 = vmul.f32 %v349, %v683
        %v688 = vmul.f32 %v350, %v683
        %v689 = vmul.f32 %v351, %v683
        %v690 = vmul.f32 %v352, %v683
        %v691 = vmul.f32 %v353, %v683
        %v692 = vmul.f32 %v354, %v683
        %v693 = vsub.f32 %v640, %v685
        %v694 = vsub.f32 %v645, %v686
        %v695 = vsub.f32 %v650, %v687
        %v696 = vsub.f32 %v655, %v688
        %v697 = vsub.f32 %v660, %v689
        %v698 = vsub.f32 %v665, %v690
        %v699 = vsub.f32 %v670, %v691
        %v700 = vsub.f32 %v675, %v692
        %v701 = vmul.f32 %v395, %v693
        %v702 = vmul.f32 %v396, %v694
        %v703 = vmul.f32 %v397, %v695
        %v704 = vmul.f32 %v398, %v696
        %v705 = vmul.f32 %v399, %v697
        %v706 = vmul.f32 %v400, %v698
        %v707 = vmul.f32 %v401, %v699
        %v708 = vmul.f32 %v402, %v700
        %v709 = vld [vmem:[%s3] sm:$0x1]
        %v711 = vlaneseq
        %v712 = vshrl.u32 %v711, 7
        %v713 = vsub.s32 0, %v712
        %v714 = vrot.slane %v709, %v713
        %v716 = vadd.f32 %v701, %v714
        %v717 = vadd.f32 %v702, %v714
        %v718 = vadd.f32 %v703, %v714
        %v719 = vadd.f32 %v704, %v714
        %v720 = vadd.f32 %v705, %v714
        %v721 = vadd.f32 %v706, %v714
        %v722 = vadd.f32 %v707, %v714
        %v723 = vadd.f32 %v708, %v714
        %724 = vst.msk [vmem:[%s193] sm:$0xff] %vm218, %v716
        %725 = vst.msk [vmem:[%s193 + $0x8] sm:$0xff] %vm218, %v717
        %726 = vst.msk [vmem:[%s193 + $0x10] sm:$0xff] %vm218, %v718
        %727 = vst.msk [vmem:[%s193 + $0x18] sm:$0xff] %vm218, %v719
        %728 = vst.msk [vmem:[%s193 + $0x20] sm:$0xff] %vm218, %v720
        %729 = vst.msk [vmem:[%s193 + $0x28] sm:$0xff] %vm218, %v721
        %730 = vst.msk [vmem:[%s193 + $0x30] sm:$0xff] %vm218, %v722
        %731 = vst.msk [vmem:[%s193 + $0x38] sm:$0xff] %vm218, %v723
        %s732 = sand.u32 %s115, 1
        %s733 = scalar_lea.sflag [#allocation3], %s732
        %s734 = sand.u32 %s115, 1
        %s735 = smul.addr %s734, 64
        %s736 = scalar_lea.vmem [#allocation2], %s735
        // Predicated region
        $region37: #{patch_merging.1} parent=35 // pred_check
          %p737 = pneg %p125
        $region38: #{patch_merging.1} parent=35 // pred_check_branch
          %739 = sbr.rel (%p737) target = $region40
        $region39: #{patch_merging.1} parent=35 // pred_region
          %s740 = smul.u32 8, %s18
          %s742 = ssub.s32 1024, 1024
          %743 = vsyncadd %s733, %s742
          %s744 = smul.addr %s740, 128
          %s745 = scalar_lea.hbm %s4, %s744
          %s746 = sshll.u32 %s736, 4
          %s747 = int_to_ptr.vmem [resolvable:$true] %s746
          %752 = dma.vmem_to_hbm [thread:$0]  %s747, 1024, %s745, %s733, 128, 128, 8
        $region40: #{patch_merging.1} parent=35 // pred_fallthru
          _
      $region36: #{patch_merging.1} parent=5 // pred_fallthru
        _
      %p753 = scmp.le.s32.totalorder 2, %s13
      // Predicated region
      $region41: #{patch_merging.1} parent=5 // pred_check
        %p754 = pneg %p753
      $region42: #{patch_merging.1} parent=5 // pred_check_branch
        %756 = sbr.rel (%p754) target = $region44
      $region43: #{patch_merging.1} parent=5 // pred_region
        %s757 = ssub.s32 %s13, 2
        // Predicated region
        $region45: #{patch_merging.1} parent=43 // pred_check
          %p758 = pneg %p131
        $region46: #{patch_merging.1} parent=43 // pred_check_branch
          %760 = sbr.rel (%p758) target = $region48
        $region47: #{patch_merging.1} parent=43 // pred_region
          %s761 = sand.u32 %s116, 1
          %s762 = scalar_lea.sflag [#allocation3], %s761
          %s763 = sand.u32 %s116, 1
          %s764 = smul.addr %s763, 64
          %s765 = scalar_lea.vmem [#allocation2], %s764
          %766 = dma.done %s762, 1024
        $region48: #{patch_merging.1} parent=43 // pred_fallthru
          _
      $region44: #{patch_merging.1} parent=5 // pred_fallthru
        _
    $region6: #{patch_merging.1} parent=1 // loop_footer
      %s17 = sadd.s32 1, %s13
    $region7: #{patch_merging.1} parent=1 // loop_footer_branch
      %12 = sbr.rel target = $region3
    $region8: #{patch_merging.1} parent=1 // loop_exit
      _
    %767 = vsyncpa [#allocation3], 1
    %s768 = scalar_lea.sflag [#allocation3], 1
    %769 = vsyncpa %s768, 1

</llo_original>
